<compile_context>
chip_gen: v7x
topology: tpu7x:2x2x1
jax: 0.10.0
libtpu: 0.0.40
codegen_flags: <defaults>
</compile_context>

<pallas_src>
import functools

import jax
import jax.numpy as jnp
from jax import lax
from jax.experimental import pallas as pl
from jax.experimental.pallas import tpu as pltpu

BN_EPS = 1e-5


def _round_up(x, m):
    return -(-x // m) * m


def _conv_relu_stats_kernel(p_ref, w_ref, b_ref, y_ref, sum_ref, ssq_ref, *,
                            tiles_per_img, s_tail, needs_mask):
    """Per-M-tile (transposed): y^T = relu(W @ patches^T + b); accumulate channel sum/sumsq."""
    i = pl.program_id(0)

    @pl.when(i == 0)
    def _():
        sum_ref[...] = jnp.zeros_like(sum_ref)
        ssq_ref[...] = jnp.zeros_like(ssq_ref)

    # (Cout, K) @ (K, tm) -> (Cout, tm); f32 accumulation on the MXU, lanes carry M.
    y = jnp.dot(w_ref[...], p_ref[...], preferred_element_type=jnp.float32)
    y = jnp.maximum(y + b_ref[...], 0.0)                       # bias + ReLU
    y_ref[...] = y.astype(y_ref.dtype)                         # bf16 intermediate

    def _acc(vals):
        sum_ref[...] += jnp.sum(vals, axis=1, keepdims=True)
        ssq_ref[...] += jnp.sum(vals * vals, axis=1, keepdims=True)

    def _acc_masked():
        lane = lax.broadcasted_iota(jnp.int32, y.shape, 1)     # column within this tile
        _acc(jnp.where(lane < s_tail, y, 0.0))

    if not needs_mask:
        _acc(y)                                                # Sp == Ho*Wo: nothing to mask
    elif tiles_per_img == 1:
        _acc_masked()                                          # every tile is a tail tile
    else:
        is_tail = (i % tiles_per_img) == (tiles_per_img - 1)
        pl.when(jnp.logical_not(is_tail))(lambda: _acc(y))     # interior tiles: fast path
        pl.when(is_tail)(_acc_masked)                          # per-image tail tile: mask


def _bn_apply_kernel(y_ref, scale_ref, shift_ref, o_ref, *, s):
    # scale = gamma * rsqrt(var + eps); shift = beta - mean * scale  -> one FMA per element.
    # Writes the result directly as an NCHW block (n, Cout, Ho*Wo); padded columns dropped.
    z = y_ref[...].astype(jnp.float32) * scale_ref[...] + shift_ref[...]   # (Cout, Sp)
    o_ref[...] = z[None, :, :s]


@functools.partial(jax.jit, static_argnames=("stride", "padding", "tm_cap"))
def std_conv_forward(x, w, b, gamma, beta, *, stride=2, padding=1, tm_cap=4096):
    """x: [N, Cin, H, W] (NCHW).  Returns [N, Cout, Ho, Wo] (NCHW), float32."""
    N, Cin, H, W = x.shape
    Cout, _, KH, KW = w.shape
    Ho = (H + 2 * padding - KH) // stride + 1
    Wo = (W + 2 * padding - KW) // stride + 1
    S = Ho * Wo                       # spatial positions per image
    K = Cin * KH * KW

    # Per-image spatial padding to a lane multiple; tm = largest 128-multiple dividing Sp.
    Sp = _round_up(S, 128)
    cap = max(128, (tm_cap // 128) * 128)
    tm = 128
    for cand in range(min(Sp, cap), 127, -128):
        if Sp % cand == 0:
            tm = cand
            break
    tiles_per_img = Sp // tm
    n_tiles = N * tiles_per_img
    Mp = N * Sp
    needs_mask = Sp != S
    s_tail = S - (tiles_per_img - 1) * tm      # valid columns in each image's last tile

    # ---- glue: im2col in bf16, transposed to [K, Mp] (lanes carry M), per-image padded ----
    xb = x.astype(jnp.bfloat16)
    xp = jnp.pad(xb, ((0, 0), (0, 0), (padding, padding), (padding, padding)))
    cols = []
    for kh in range(KH):
        for kw in range(KW):
            cols.append(
                xp[:, :,
                   kh: kh + stride * (Ho - 1) + 1: stride,
                   kw: kw + stride * (Wo - 1) + 1: stride])          # (N, Cin, Ho, Wo)
    pT = jnp.stack(cols, axis=0).reshape(KH, KW, N, Cin, Ho, Wo)
    pT = pT.transpose(3, 0, 1, 2, 4, 5).reshape(K, N, S)             # K ordered (Cin, KH, KW)
    pT = jnp.pad(pT, ((0, 0), (0, 0), (0, Sp - S))).reshape(K, Mp)   # [K, N*Sp], bf16

    wT = w.reshape(Cout, K).astype(jnp.bfloat16)                     # [Cout, K]
    b_col = b.astype(jnp.float32).reshape(Cout, 1)

    # ---- pass 1: conv (bf16 MXU, f32 acc) + bias + ReLU + per-channel stats ----
    # TODO(synk): on v7x, switch the stat accumulators to per-tile partials so this grid
    # axis can be marked "parallel" and shard across both TensorCores.
    kernel1 = functools.partial(_conv_relu_stats_kernel,
                                tiles_per_img=tiles_per_img,
                                s_tail=s_tail, needs_mask=needs_mask)
    y, ysum, yssq = pl.pallas_call(
        kernel1,
        grid=(n_tiles,),
        in_specs=[
            pl.BlockSpec((K, tm), lambda i: (0, i)),        # patches^T, tiled over M (lanes)
            pl.BlockSpec((Cout, K), lambda i: (0, 0)),      # weight, resident
            pl.BlockSpec((Cout, 1), lambda i: (0, 0)),      # bias, resident
        ],
        out_specs=[
            pl.BlockSpec((Cout, tm), lambda i: (0, i)),     # y^T = relu(conv), bf16
            pl.BlockSpec((Cout, 1), lambda i: (0, 0)),      # per-channel sum (accumulator)
            pl.BlockSpec((Cout, 1), lambda i: (0, 0)),      # per-channel sumsq (accumulator)
        ],
        out_shape=[
            jax.ShapeDtypeStruct((Cout, Mp), jnp.bfloat16),
            jax.ShapeDtypeStruct((Cout, 1), jnp.float32),
            jax.ShapeDtypeStruct((Cout, 1), jnp.float32),
        ],
        compiler_params=pltpu.CompilerParams(
            dimension_semantics=("arbitrary",),             # resident running-stat accumulators
            vmem_limit_bytes=32 * 1024 * 1024),
    )(pT, wT, b_col)

    # ---- tiny per-channel BN math (negligible) -> fused scale / shift ----
    # TODO(synk): E[y^2]-E[y]^2 in f32 can lose precision for very low-variance channels at
    # huge M; a centered/compensated second pass would be safer if exact BN parity matters.
    count = float(N * S)
    mean = ysum[:, 0] / count
    var = jnp.maximum(yssq[:, 0] / count - mean * mean, 0.0)   # biased var (PyTorch BN fwd)
    scale = gamma.astype(jnp.float32) * lax.rsqrt(var + BN_EPS)
    shift = beta.astype(jnp.float32) - mean * scale
    scale_col = scale.reshape(Cout, 1)
    shift_col = shift.reshape(Cout, 1)

    # ---- pass 2: y*scale + shift, written directly as NCHW [N, Cout, Ho*Wo] ----
    kernel2 = functools.partial(_bn_apply_kernel, s=S)
    out = pl.pallas_call(
        kernel2,
        grid=(N,),
        in_specs=[
            pl.BlockSpec((Cout, Sp), lambda n: (0, n)),     # one image's y^T slab
            pl.BlockSpec((Cout, 1), lambda n: (0, 0)),
            pl.BlockSpec((Cout, 1), lambda n: (0, 0)),
        ],
        out_specs=pl.BlockSpec((1, Cout, S), lambda n: (n, 0, 0)),
        out_shape=jax.ShapeDtypeStruct((N, Cout, S), jnp.float32),
        compiler_params=pltpu.CompilerParams(
            dimension_semantics=("parallel",),              # megacore-shardable over batch
            vmem_limit_bytes=32 * 1024 * 1024),
    )(y, scale_col, shift_col)

    # TODO(synk): Dropout(p=0.1) is identity here (eval semantics); training-mode dropout
    # needs pltpu.prng_seed + stateful_bernoulli and a 1/(1-p) scale.
    return out.reshape(N, Cout, Ho, Wo)                     # free reshape (contiguous split)


def _reference(x, w, b, gamma, beta, stride=2, padding=1):
    y = lax.conv_general_dilated(
        x, w, window_strides=(stride, stride),
        padding=((padding, padding), (padding, padding)),
        dimension_numbers=("NCHW", "OIHW", "NCHW"))
    y = y + b[None, :, None, None]
    y = jnp.maximum(y, 0.0)
    mean = jnp.mean(y, axis=(0, 2, 3), keepdims=True)
    var = jnp.mean((y - mean) ** 2, axis=(0, 2, 3), keepdims=True)
    y = (y - mean) * lax.rsqrt(var + BN_EPS)
    return y * gamma[None, :, None, None] + beta[None, :, None, None]


if __name__ == "__main__":
    key = jax.random.PRNGKey(0)
    kx, kw, kb, kx2, kx3 = jax.random.split(key, 5)

    Cin, Cout, KH, KW = 4, 8, 3, 3
    w = 0.1 * jax.random.normal(kw, (Cout, Cin, KH, KW), jnp.float32)
    b = 0.1 * jax.random.normal(kb, (Cout,), jnp.float32)
    gamma = jnp.ones((Cout,), jnp.float32)
    beta = jnp.zeros((Cout,), jnp.float32)

    # Tolerance: bf16 matmul operands + bf16 y intermediate vs. a pure-f32 reference.
    TOL = 1e-1

    # 1) Small module-spec shape: S=64 < 128, single tile per image, masked-tail path.
    x1 = jax.random.normal(kx, (2, Cin, 16, 16), jnp.float32)
    out1 = jax.block_until_ready(std_conv_forward(x1, w, b, gamma, beta, stride=2, padding=1))
    ref1 = _reference(x1, w, b, gamma, beta)
    assert out1.shape == (2, Cout, 8, 8), out1.shape
    err1 = float(jnp.max(jnp.abs(out1 - ref1)))
    assert err1 < TOL, err1

    # 2) Larger shape with a small tm cap: multiple tiles per image -> interior (unmasked)
    #    tiles + per-image masked tail tiles, multi-step grid.
    x2 = jax.random.normal(kx2, (2, Cin, 48, 48), jnp.float32)
    out2 = jax.block_until_ready(
        std_conv_forward(x2, w, b, gamma, beta, stride=2, padding=1, tm_cap=128))
    ref2 = _reference(x2, w, b, gamma, beta)
    assert out2.shape == (2, Cout, 24, 24), out2.shape
    err2 = float(jnp.max(jnp.abs(out2 - ref2)))
    assert err2 < TOL, err2

    # 3) Shape whose spatial size is already a lane multiple (S=256): unmasked fast path.
    x3 = jax.random.normal(kx3, (2, Cin, 32, 32), jnp.float32)
    out3 = jax.block_until_ready(std_conv_forward(x3, w, b, gamma, beta, stride=2, padding=1))
    ref3 = _reference(x3, w, b, gamma, beta)
    assert out3.shape == (2, Cout, 16, 16), out3.shape
    err3 = float(jnp.max(jnp.abs(out3 - ref3)))
    assert err3 < TOL, err3

    print("KERNEL_OK")
</pallas_src>

<mosaic_0001>
module attributes {stable_mosaic.version = 11 : i64} {
  func.func @_conv_relu_stats_kernel(%arg0: i32, %arg1: memref<36x128xbf16, #tpu.memory_space<vmem>>, %arg2: memref<8x36xbf16, #tpu.memory_space<vmem>>, %arg3: memref<8x1xf32, #tpu.memory_space<vmem>>, %arg4: memref<8x128xbf16, #tpu.memory_space<vmem>>, %arg5: memref<8x1xf32, #tpu.memory_space<vmem>>, %arg6: memref<8x1xf32, #tpu.memory_space<vmem>>) attributes {dimension_semantics = [#tpu.dimension_semantics<arbitrary>], iteration_bounds = array<i64: 2>, scalar_prefetch = 0 : i64, scratch_operands = 0 : i64, tpu.core_type = #tpu.core_type<tc>, window_params = [{transform_indices = @transform_0, window_bounds = array<i64: 36, 128>}, {pipeline_mode = #tpu.pipeline_mode<synchronous>, transform_indices = @transform_1, window_bounds = array<i64: 8, 36>}, {pipeline_mode = #tpu.pipeline_mode<synchronous>, transform_indices = @transform_2, window_bounds = array<i64: 8, 1>}, {transform_indices = @transform_3, window_bounds = array<i64: 8, 128>}, {pipeline_mode = #tpu.pipeline_mode<synchronous>, transform_indices = @transform_4, window_bounds = array<i64: 8, 1>}, {pipeline_mode = #tpu.pipeline_mode<synchronous>, transform_indices = @transform_5, window_bounds = array<i64: 8, 1>}]} {
    %c0_i32 = arith.constant 0 : i32
    %0 = arith.cmpi eq, %arg0, %c0_i32 : i32
    %1 = arith.extui %0 : i1 to i32
    %c0_i32_0 = arith.constant 0 : i32
    %2 = arith.cmpi ne, %1, %c0_i32_0 : i32
    scf.if %2 {
      %cst_20 = arith.constant 0.000000e+00 : f32
      %29 = vector.broadcast %cst_20 : f32 to vector<8x1xf32>
      %c0_21 = arith.constant 0 : index
      %c0_22 = arith.constant 0 : index
      %30 = vector.load %arg5[%c0_21, %c0_22] : memref<8x1xf32, #tpu.memory_space<vmem>>, vector<8x1xf32>
      tpu.vector_store %arg5[%c0_21, %c0_22], %29 {strides = array<i32>} : memref<8x1xf32, #tpu.memory_space<vmem>>, vector<8x1xf32>,
      %cst_23 = arith.constant 0.000000e+00 : f32
      %31 = vector.broadcast %cst_23 : f32 to vector<8x1xf32>
      %c0_24 = arith.constant 0 : index
      %c0_25 = arith.constant 0 : index
      %32 = vector.load %arg6[%c0_24, %c0_25] : memref<8x1xf32, #tpu.memory_space<vmem>>, vector<8x1xf32>
      tpu.vector_store %arg6[%c0_24, %c0_25], %31 {strides = array<i32>} : memref<8x1xf32, #tpu.memory_space<vmem>>, vector<8x1xf32>,
    } else {
    }
    %c0 = arith.constant 0 : index
    %c0_1 = arith.constant 0 : index
    %3 = vector.load %arg2[%c0, %c0_1] : memref<8x36xbf16, #tpu.memory_space<vmem>>, vector<8x36xbf16>
    %c0_2 = arith.constant 0 : index
    %c0_3 = arith.constant 0 : index
    %4 = vector.load %arg1[%c0_2, %c0_3] : memref<36x128xbf16, #tpu.memory_space<vmem>>, vector<36x128xbf16>
    %cst = arith.constant dense<0.000000e+00> : vector<8x128xf32>
    %5 = tpu.matmul %3, %4, %cst {dimension_numbers = #tpu.dot_dimension_numbers<[1], [0], [0], [1], [0, 0, 1, 1], [], []>} : vector<8x36xbf16>, vector<36x128xbf16>, vector<8x128xf32> -> vector<8x128xf32>
    %c0_4 = arith.constant 0 : index
    %c0_5 = arith.constant 0 : index
    %6 = vector.load %arg3[%c0_4, %c0_5] : memref<8x1xf32, #tpu.memory_space<vmem>>, vector<8x1xf32>
    %7 = vector.broadcast %6 : vector<8x1xf32> to vector<8x128xf32>
    %8 = arith.addf %5, %7 : vector<8x128xf32>
    %cst_6 = arith.constant 0.000000e+00 : f32
    %9 = vector.broadcast %cst_6 : f32 to vector<8x128xf32>
    %10 = arith.maximumf %8, %9 : vector<8x128xf32>
    %11 = arith.truncf %10 : vector<8x128xf32> to vector<8x128xbf16>
    %c0_7 = arith.constant 0 : index
    %c0_8 = arith.constant 0 : index
    %12 = vector.load %arg4[%c0_7, %c0_8] : memref<8x128xbf16, #tpu.memory_space<vmem>>, vector<8x128xbf16>
    tpu.vector_store %arg4[%c0_7, %c0_8], %11 {strides = array<i32>} : memref<8x128xbf16, #tpu.memory_space<vmem>>, vector<8x128xbf16>,
    %13 = tpu.iota {dimensions = array<i32: 1>} : vector<8x128xi32>
    %c64_i32 = arith.constant 64 : i32
    %14 = vector.broadcast %c64_i32 : i32 to vector<8x128xi32>
    %15 = arith.cmpi slt, %13, %14 : vector<8x128xi32>
    %cst_9 = arith.constant 0.000000e+00 : f32
    %16 = vector.broadcast %cst_9 : f32 to vector<8x128xf32>
    %17 = arith.select %15, %10, %16 : vector<8x128xi1>, vector<8x128xf32>
    %c0_10 = arith.constant 0 : index
    %c0_11 = arith.constant 0 : index
    %18 = vector.load %arg5[%c0_10, %c0_11] : memref<8x1xf32, #tpu.memory_space<vmem>>, vector<8x1xf32>
    %cst_12 = arith.constant dense<0.000000e+00> : vector<8xf32>
    %19 = vector.multi_reduction <add>, %17, %cst_12 [1] : vector<8x128xf32> to vector<8xf32>
    %20 = vector.shape_cast %19 : vector<8xf32> to vector<8x1xf32>
    %21 = arith.addf %18, %20 : vector<8x1xf32>
    %c0_13 = arith.constant 0 : index
    %c0_14 = arith.constant 0 : index
    %22 = vector.load %arg5[%c0_13, %c0_14] : memref<8x1xf32, #tpu.memory_space<vmem>>, vector<8x1xf32>
    tpu.vector_store %arg5[%c0_13, %c0_14], %21 {strides = array<i32>} : memref<8x1xf32, #tpu.memory_space<vmem>>, vector<8x1xf32>,
    %c0_15 = arith.constant 0 : index
    %c0_16 = arith.constant 0 : index
    %23 = vector.load %arg6[%c0_15, %c0_16] : memref<8x1xf32, #tpu.memory_space<vmem>>, vector<8x1xf32>
    %24 = arith.mulf %17, %17 : vector<8x128xf32>
    %cst_17 = arith.constant dense<0.000000e+00> : vector<8xf32>
    %25 = vector.multi_reduction <add>, %24, %cst_17 [1] : vector<8x128xf32> to vector<8xf32>
    %26 = vector.shape_cast %25 : vector<8xf32> to vector<8x1xf32>
    %27 = arith.addf %23, %26 : vector<8x1xf32>
    %c0_18 = arith.constant 0 : index
    %c0_19 = arith.constant 0 : index
    %28 = vector.load %arg6[%c0_18, %c0_19] : memref<8x1xf32, #tpu.memory_space<vmem>>, vector<8x1xf32>
    tpu.vector_store %arg6[%c0_18, %c0_19], %27 {strides = array<i32>} : memref<8x1xf32, #tpu.memory_space<vmem>>, vector<8x1xf32>,
    return
  }
  func.func @transform_0(%arg0: i32) -> (i32, i32) {
    %c0_i32 = arith.constant 0 : i32
    %c0_i32_0 = arith.constant 0 : i32
    return %c0_i32, %arg0 : i32, i32
  }
  func.func @transform_1(%arg0: i32) -> (i32, i32) {
    %c0_i32 = arith.constant 0 : i32
    %c0_i32_0 = arith.constant 0 : i32
    %c0_i32_1 = arith.constant 0 : i32
    return %c0_i32, %c0_i32_0 : i32, i32
  }
  func.func @transform_2(%arg0: i32) -> (i32, i32) {
    %c0_i32 = arith.constant 0 : i32
    %c0_i32_0 = arith.constant 0 : i32
    %c0_i32_1 = arith.constant 0 : i32
    return %c0_i32, %c0_i32_0 : i32, i32
  }
  func.func @transform_3(%arg0: i32) -> (i32, i32) {
    %c0_i32 = arith.constant 0 : i32
    %c0_i32_0 = arith.constant 0 : i32
    return %c0_i32, %arg0 : i32, i32
  }
  func.func @transform_4(%arg0: i32) -> (i32, i32) {
    %c0_i32 = arith.constant 0 : i32
    %c0_i32_0 = arith.constant 0 : i32
    %c0_i32_1 = arith.constant 0 : i32
    return %c0_i32, %c0_i32_0 : i32, i32
  }
  func.func @transform_5(%arg0: i32) -> (i32, i32) {
    %c0_i32 = arith.constant 0 : i32
    %c0_i32_0 = arith.constant 0 : i32
    %c0_i32_1 = arith.constant 0 : i32
    return %c0_i32, %c0_i32_0 : i32, i32
  }
}

module attributes {stable_mosaic.version = 11 : i64} {
  func.func @_bn_apply_kernel(%arg0: i32, %arg1: memref<8x128xbf16, #tpu.memory_space<vmem>>, %arg2: memref<8x1xf32, #tpu.memory_space<vmem>>, %arg3: memref<8x1xf32, #tpu.memory_space<vmem>>, %arg4: memref<1x8x64xf32, #tpu.memory_space<vmem>>) attributes {dimension_semantics = [#tpu.dimension_semantics<parallel>], iteration_bounds = array<i64: 2>, scalar_prefetch = 0 : i64, scratch_operands = 0 : i64, tpu.core_type = #tpu.core_type<tc>, window_params = [{transform_indices = @transform_0, window_bounds = array<i64: 8, 128>}, {pipeline_mode = #tpu.pipeline_mode<synchronous>, transform_indices = @transform_1, window_bounds = array<i64: 8, 1>}, {pipeline_mode = #tpu.pipeline_mode<synchronous>, transform_indices = @transform_2, window_bounds = array<i64: 8, 1>}, {transform_indices = @transform_3, window_bounds = array<i64: 1, 8, 64>}]} {
    %c0 = arith.constant 0 : index
    %c0_0 = arith.constant 0 : index
    %0 = vector.load %arg1[%c0, %c0_0] : memref<8x128xbf16, #tpu.memory_space<vmem>>, vector<8x128xbf16>
    %1 = arith.extf %0 : vector<8x128xbf16> to vector<8x128xf32>
    %c0_1 = arith.constant 0 : index
    %c0_2 = arith.constant 0 : index
    %2 = vector.load %arg2[%c0_1, %c0_2] : memref<8x1xf32, #tpu.memory_space<vmem>>, vector<8x1xf32>
    %3 = vector.broadcast %2 : vector<8x1xf32> to vector<8x128xf32>
    %4 = arith.mulf %1, %3 : vector<8x128xf32>
    %c0_3 = arith.constant 0 : index
    %c0_4 = arith.constant 0 : index
    %5 = vector.load %arg3[%c0_3, %c0_4] : memref<8x1xf32, #tpu.memory_space<vmem>>, vector<8x1xf32>
    %6 = vector.broadcast %5 : vector<8x1xf32> to vector<8x128xf32>
    %7 = arith.addf %4, %6 : vector<8x128xf32>
    %8 = vector.extract_strided_slice %7 {offsets = [0, 0], sizes = [8, 64], strides = [1, 1]} : vector<8x128xf32> to vector<8x64xf32>
    %9 = vector.shape_cast %8 : vector<8x64xf32> to vector<1x8x64xf32>
    %c0_5 = arith.constant 0 : index
    %c0_6 = arith.constant 0 : index
    %c0_7 = arith.constant 0 : index
    %10 = vector.load %arg4[%c0_5, %c0_6, %c0_7] : memref<1x8x64xf32, #tpu.memory_space<vmem>>, vector<1x8x64xf32>
    tpu.vector_store %arg4[%c0_5, %c0_6, %c0_7], %9 {strides = array<i32>} : memref<1x8x64xf32, #tpu.memory_space<vmem>>, vector<1x8x64xf32>,
    return
  }
  func.func @transform_0(%arg0: i32) -> (i32, i32) {
    %c0_i32 = arith.constant 0 : i32
    %c0_i32_0 = arith.constant 0 : i32
    return %c0_i32, %arg0 : i32, i32
  }
  func.func @transform_1(%arg0: i32) -> (i32, i32) {
    %c0_i32 = arith.constant 0 : i32
    %c0_i32_0 = arith.constant 0 : i32
    %c0_i32_1 = arith.constant 0 : i32
    return %c0_i32, %c0_i32_0 : i32, i32
  }
  func.func @transform_2(%arg0: i32) -> (i32, i32) {
    %c0_i32 = arith.constant 0 : i32
    %c0_i32_0 = arith.constant 0 : i32
    %c0_i32_1 = arith.constant 0 : i32
    return %c0_i32, %c0_i32_0 : i32, i32
  }
  func.func @transform_3(%arg0: i32) -> (i32, i32, i32) {
    %c0_i32 = arith.constant 0 : i32
    %c0_i32_0 = arith.constant 0 : i32
    %c0_i32_1 = arith.constant 0 : i32
    return %arg0, %c0_i32, %c0_i32_0 : i32, i32, i32
  }
}

</mosaic_0001>

<llo_original>
// kernel: std_conv_forward.3
$region0: #{std_conv_forward.3}
  #allocation0 [shape = 'u32[]', space=smem, size = 0x4, offset = 0x4, fixed_abs, tag = 'smem constant byte address 0x4 - core index']
  #allocation1 [shape = 'u32[144,128]{1,0:T(1,128)}', space=vmem, size = 0x12000, scoped, tag = 'internal scratch']
  %s0 = inlined_call_operand.vmem [shape: bf16[8,256], index: 0, kind: input, shape index: {}]
  %s1 = inlined_call_operand.vmem [shape: f32[8,1], index: 1, kind: input, shape index: {}]
  %s2 = inlined_call_operand.vmem [shape: f32[8,1], index: 2, kind: input, shape index: {}]
  %s3 = inlined_call_operand.vmem [shape: f32[2,8,64], index: 3, kind: output, shape index: {}]
  %s4 = sld [smem:[#allocation0]]
  $region45: #{std_conv_forward.3} parent=0
    _
  %s6 = ssub.s32 1, %s4
  %s7 = scalar_select 0, %s6, %s4
  loop: start=0, step=1, limit=4
  $region2: #{std_conv_forward.3} parent=0 // loop_pre_header
    _
  $region3: #{std_conv_forward.3} parent=0 // loop_header
    %s9 = sphi 0, %s13
    %p10 = scmp.ge.s32.totalorder %s9, 4
    %s19 = sphi 0, %s21
    %s22 = sphi 0, %s19
    %s23 = sphi 0, %s22
    %s39 = sphi 0, %s23
    %s43 = sphi 0, %s43
    %s45 = sphi 0, %s43
    %s46 = sphi 0, %s45
    %s60 = sphi 0, %s46
    %s64 = sphi 0, %s64
    %s66 = sphi 0, %s64
    %s67 = sphi 0, %s66
    %s81 = sphi 0, %s67
    %s87 = sphi 0, %s89
    %s90 = sphi 0, %s87
    %s91 = sphi 0, %s90
    %s107 = sphi 0, %s91
  $region4: #{std_conv_forward.3} parent=0 // loop_header_branch
    %12 = sbr.rel (%p10) target = $region8
  $region5: #{std_conv_forward.3} parent=0 // loop_body
    %s14 = ssub.s32 %s9, 1
    %s15 = ssub.s32 %s9, 2
    %s16 = sadd.s32 %s9, 1
    %s17 = ssub.s32 %s9, %s16
    %p18 = scmp.eq.s32.totalorder %s17, 0
    %s20 = sadd.s32 %s19, 1
    %s21 = scalar_select %p18, %s19, %s20
    %p24 = pneg %p18
    %p25 = scmp.eq.s32.totalorder %s9, 1
    %p26 = por %p24, %p25
    %p27 = scmp.ne.s32.totalorder %s19, %s22
    %p28 = scmp.eq.s32.totalorder %s9, 0
    %p29 = por %p27, %p28
    %p30 = scmp.ne.s32.totalorder %s19, %s22
    %p31 = scmp.eq.s32.totalorder %s14, 1
    %p32 = por %p30, %p31
    %p33 = scmp.ne.s32.totalorder %s22, %s23
    %p34 = scmp.eq.s32.totalorder %s14, 0
    %p35 = por %p33, %p34
    %p36 = scmp.ne.s32.totalorder %s22, %s23
    %p37 = scmp.eq.s32.totalorder %s15, 1
    %p38 = por %p36, %p37
    %p40 = scmp.ne.s32.totalorder %s23, %s39
    %p41 = scmp.eq.s32.totalorder %s15, 0
    %p42 = por %p40, %p41
    %s44 = sadd.s32 %s43, 1
    %p47 = scmp.eq.s32.totalorder %s9, 1
    %p48 = scmp.ne.s32.totalorder %s43, %s45
    %p49 = scmp.eq.s32.totalorder %s9, 0
    %p50 = por %p48, %p49
    %p51 = scmp.ne.s32.totalorder %s43, %s45
    %p52 = scmp.eq.s32.totalorder %s14, 1
    %p53 = por %p51, %p52
    %p54 = scmp.ne.s32.totalorder %s45, %s46
    %p55 = scmp.eq.s32.totalorder %s14, 0
    %p56 = por %p54, %p55
    %p57 = scmp.ne.s32.totalorder %s45, %s46
    %p58 = scmp.eq.s32.totalorder %s15, 1
    %p59 = por %p57, %p58
    %p61 = scmp.ne.s32.totalorder %s46, %s60
    %p62 = scmp.eq.s32.totalorder %s15, 0
    %p63 = por %p61, %p62
    %s65 = sadd.s32 %s64, 1
    %p68 = scmp.eq.s32.totalorder %s9, 1
    %p69 = scmp.ne.s32.totalorder %s64, %s66
    %p70 = scmp.eq.s32.totalorder %s9, 0
    %p71 = por %p69, %p70
    %p72 = scmp.ne.s32.totalorder %s64, %s66
    %p73 = scmp.eq.s32.totalorder %s14, 1
    %p74 = por %p72, %p73
    %p75 = scmp.ne.s32.totalorder %s66, %s67
    %p76 = scmp.eq.s32.totalorder %s14, 0
    %p77 = por %p75, %p76
    %p78 = scmp.ne.s32.totalorder %s66, %s67
    %p79 = scmp.eq.s32.totalorder %s15, 1
    %p80 = por %p78, %p79
    %p82 = scmp.ne.s32.totalorder %s67, %s81
    %p83 = scmp.eq.s32.totalorder %s15, 0
    %p84 = por %p82, %p83
    %s85 = ssub.s32 %s9, %s16
    %p86 = scmp.eq.s32.totalorder %s85, 0
    %s88 = sadd.s32 %s87, 1
    %s89 = scalar_select %p86, %s87, %s88
    %p92 = pneg %p86
    %p93 = scmp.eq.s32.totalorder %s9, 1
    %p94 = por %p92, %p93
    %p95 = scmp.ne.s32.totalorder %s87, %s90
    %p96 = scmp.eq.s32.totalorder %s9, 0
    %p97 = por %p95, %p96
    %p98 = scmp.ne.s32.totalorder %s87, %s90
    %p99 = scmp.eq.s32.totalorder %s14, 1
    %p100 = por %p98, %p99
    %p101 = scmp.ne.s32.totalorder %s90, %s91
    %p102 = scmp.eq.s32.totalorder %s14, 0
    %p103 = por %p101, %p102
    %p104 = scmp.ne.s32.totalorder %s90, %s91
    %p105 = scmp.eq.s32.totalorder %s15, 1
    %p106 = por %p104, %p105
    %p108 = scmp.ne.s32.totalorder %s91, %s107
    %p109 = scmp.eq.s32.totalorder %s15, 0
    %p110 = por %p108, %p109
    %p111 = scmp.le.s32.totalorder 1, %s9
    %p112 = scmp.lt.s32.totalorder %s9, 3
    %p113 = pnand %p111, %p112
    %p114 = pneg %p113
    // Predicated region
    $region9: #{std_conv_forward.3} parent=5 // pred_check
      _
    $region10: #{std_conv_forward.3} parent=5 // pred_check_branch
      %116 = sbr.rel (%p113) target = $region12
    $region11: #{std_conv_forward.3} parent=5 // pred_region
      %s117 = ssub.s32 %s9, 1
      // Predicated region
      $region13: #{std_conv_forward.3} parent=11 // pred_check
        %p118 = pneg %p56
      $region14: #{std_conv_forward.3} parent=11 // pred_check_branch
        %120 = sbr.rel (%p118) target = $region16
      $region15: #{std_conv_forward.3} parent=11 // pred_region
        _
      $region16: #{std_conv_forward.3} parent=11 // pred_fallthru
        _
      // Predicated region
      $region17: #{std_conv_forward.3} parent=11 // pred_check
        %p121 = pneg %p77
      $region18: #{std_conv_forward.3} parent=11 // pred_check_branch
        %123 = sbr.rel (%p121) target = $region20
      $region19: #{std_conv_forward.3} parent=11 // pred_region
        _
      $region20: #{std_conv_forward.3} parent=11 // pred_fallthru
        _
    $region12: #{std_conv_forward.3} parent=5 // pred_fallthru
      _
    %p124 = scmp.lt.s32.totalorder %s9, 2
    // Predicated region
    $region21: #{std_conv_forward.3} parent=5 // pred_check
      %p125 = pneg %p124
    $region22: #{std_conv_forward.3} parent=5 // pred_check_branch
      %127 = sbr.rel (%p125) target = $region24
    $region23: #{std_conv_forward.3} parent=5 // pred_region
      // Predicated region
      $region25: #{std_conv_forward.3} parent=23 // pred_check
        %p128 = pneg %p29
      $region26: #{std_conv_forward.3} parent=23 // pred_check_branch
        %130 = sbr.rel (%p128) target = $region28
      $region27: #{std_conv_forward.3} parent=23 // pred_region
        %p131 = scmp.lt.s32.totalorder %s9, 1
        %s132 = scalar_select %p131, %s9, 1
        %s133 = smul.addr %s132, 4
        %s134 = scalar_lea.vmem %s0, %s133
      $region28: #{std_conv_forward.3} parent=23 // pred_fallthru
        _
    $region24: #{std_conv_forward.3} parent=5 // pred_fallthru
      _
    %p135 = scmp.le.s32.totalorder 1, %s9
    %p136 = scmp.lt.s32.totalorder %s9, 3
    %p137 = pnand %p135, %p136
    %p138 = pneg %p137
    // Predicated region
    $region29: #{std_conv_forward.3} parent=5 // pred_check
      _
    $region30: #{std_conv_forward.3} parent=5 // pred_check_branch
      %140 = sbr.rel (%p137) target = $region32
    $region31: #{std_conv_forward.3} parent=5 // pred_region
      %s141 = ssub.s32 %s9, 1
      %p142 = scmp.lt.s32.totalorder %s14, 1
      %s143 = scalar_select %p142, %s14, 1
      %s144 = smul.addr %s143, 4
      %s145 = scalar_lea.vmem %s0, %s144
      %p146 = pneg %p35
      %p147 = pneg %p32
      %p148 = pneg %p56
      %p149 = pneg %p53
      %p150 = pneg %p77
      %p151 = pneg %p74
      %p152 = pneg %p103
      %p153 = pneg %p100
      %p154 = scmp.lt.s32.totalorder %s14, 1
      %s155 = scalar_select %p154, %s14, 1
      %s156 = smul.addr %s155, 8
      %s157 = scalar_lea.vmem %s3, %s156
      %p158 = scmp.lt.s32.totalorder %s14, 1
      %s159 = scalar_select %p158, %s14, 1
      %s160 = smul.addr %s159, 4
      %s161 = scalar_lea.vmem %s0, %s160
      %p162 = scmp.lt.s32.totalorder %s14, 1
      %s163 = scalar_select %p162, %s14, 1
      %s164 = smul.addr %s163, 8
      %s165 = scalar_lea.vmem %s3, %s164
      %v166 = vld [vmem:[%s161] sm:$0xf]
      %v167 = vunpack.c.l.bf16 %v166
      %v168 = vld [vmem:[%s1] sm:$0xff]
      %170 = vset.pattern.permute.xlu0 0
      %171 = vperm.xlu0 %170, %v168
      %v172 = vpop.permute.xlu0 %171
      %v174 = vmul.f32 %v167, %v172
      %v175 = vld [vmem:[%s2] sm:$0xff]
      %177 = vset.pattern.permute.xlu0 0
      %178 = vperm.xlu0 %177, %v175
      %v179 = vpop.permute.xlu0 %178
      %v181 = vadd.f32 %v174, %v179
      %vm182 = vcmask 523264
      %183 = vst.msk [vmem:[%s165] sm:$0xff] %vm182, %v181
      %p184 = scmp.lt.s32.totalorder %s14, 1
      %s185 = scalar_select %p184, %s14, 1
      %s186 = smul.addr %s185, 8
      %s187 = scalar_lea.vmem %s3, %s186
      // Predicated region
      $region33: #{std_conv_forward.3} parent=31 // pred_check
        %p188 = pneg %p100
      $region34: #{std_conv_forward.3} parent=31 // pred_check_branch
        %190 = sbr.rel (%p188) target = $region36
      $region35: #{std_conv_forward.3} parent=31 // pred_region
        _
      $region36: #{std_conv_forward.3} parent=31 // pred_fallthru
        _
    $region32: #{std_conv_forward.3} parent=5 // pred_fallthru
      _
    %p191 = scmp.le.s32.totalorder 2, %s9
    // Predicated region
    $region37: #{std_conv_forward.3} parent=5 // pred_check
      %p192 = pneg %p191
    $region38: #{std_conv_forward.3} parent=5 // pred_check_branch
      %194 = sbr.rel (%p192) target = $region40
    $region39: #{std_conv_forward.3} parent=5 // pred_region
      %s195 = ssub.s32 %s9, 2
      // Predicated region
      $region41: #{std_conv_forward.3} parent=39 // pred_check
        %p196 = pneg %p106
      $region42: #{std_conv_forward.3} parent=39 // pred_check_branch
        %198 = sbr.rel (%p196) target = $region44
      $region43: #{std_conv_forward.3} parent=39 // pred_region
        %p199 = scmp.lt.s32.totalorder %s15, 1
        %s200 = scalar_select %p199, %s15, 1
        %s201 = smul.addr %s200, 8
        %s202 = scalar_lea.vmem %s3, %s201
      $region44: #{std_conv_forward.3} parent=39 // pred_fallthru
        _
    $region40: #{std_conv_forward.3} parent=5 // pred_fallthru
      _
  $region6: #{std_conv_forward.3} parent=0 // loop_footer
    %s13 = sadd.s32 1, %s9
  $region7: #{std_conv_forward.3} parent=0 // loop_footer_branch
    %8 = sbr.rel target = $region3
  $region8: #{std_conv_forward.3} parent=0 // loop_exit
    _

// kernel: std_conv_forward.2
$region0: #{std_conv_forward.2}
  #allocation0 [shape = 'u32[]', space=smem, size = 0x4, offset = 0x4, fixed_abs, tag = 'smem constant byte address 0x4 - core index']
  #allocation1 [shape = 'u32[144,128]{1,0:T(1,128)}', space=vmem, size = 0x12000, scoped, tag = 'internal scratch']
  %s0 = inlined_call_operand.vmem [shape: bf16[36,256], index: 0, kind: input, shape index: {}]
  %s1 = inlined_call_operand.vmem [shape: bf16[8,36], index: 1, kind: input, shape index: {}]
  %s2 = inlined_call_operand.vmem [shape: f32[8,1], index: 2, kind: input, shape index: {}]
  %s3 = inlined_call_operand.vmem [shape: bf16[8,256], index: 3, kind: output, shape index: {0}]
  %s4 = inlined_call_operand.vmem [shape: f32[8,1], index: 4, kind: output, shape index: {1}]
  %s5 = inlined_call_operand.vmem [shape: f32[8,1], index: 5, kind: output, shape index: {2}]
  %6 = xla_tuple %s3, %s4, %s5
  %s7 = sld [smem:[#allocation0]]
  $region106: #{std_conv_forward.2} parent=0
    _
  %s9 = ssub.s32 1, %s7
  %s10 = scalar_select 0, %s9, %s7
  $region1: #{std_conv_forward.2} parent=0
    #allocation2 [shape = 'u8[20480]{0}', space=vmem, size = 0x5000, scoped, tag = 'input window, operand 0']
    loop: start=0, step=1, limit=4
    $region2: #{std_conv_forward.2} parent=1 // loop_pre_header
      _
    $region3: #{std_conv_forward.2} parent=1 // loop_header
      %s12 = sphi 0, %s16
      %p13 = scmp.ge.s32.totalorder %s12, 4
      %s22 = sphi 0, %s24
      %s25 = sphi 0, %s22
      %s26 = sphi 0, %s25
      %s42 = sphi 0, %s26
      %s46 = sphi 0, %s46
      %s48 = sphi 0, %s46
      %s49 = sphi 0, %s48
      %s63 = sphi 0, %s49
      %s67 = sphi 0, %s67
      %s69 = sphi 0, %s67
      %s70 = sphi 0, %s69
      %s84 = sphi 0, %s70
      %s90 = sphi 0, %s92
      %s93 = sphi 0, %s90
      %s94 = sphi 0, %s93
      %s110 = sphi 0, %s94
      %s114 = sphi 0, %s114
      %s116 = sphi 0, %s114
      %s117 = sphi 0, %s116
      %s131 = sphi 0, %s117
      %s135 = sphi 0, %s135
      %s137 = sphi 0, %s135
      %s138 = sphi 0, %s137
      %s152 = sphi 0, %s138
    $region4: #{std_conv_forward.2} parent=1 // loop_header_branch
      %15 = sbr.rel (%p13) target = $region8
    $region5: #{std_conv_forward.2} parent=1 // loop_body
      %s17 = ssub.s32 %s12, 1
      %s18 = ssub.s32 %s12, 2
      %s19 = sadd.s32 %s12, 1
      %s20 = ssub.s32 %s12, %s19
      %p21 = scmp.eq.s32.totalorder %s20, 0
      %s23 = sadd.s32 %s22, 1
      %s24 = scalar_select %p21, %s22, %s23
      %p27 = pneg %p21
      %p28 = scmp.eq.s32.totalorder %s12, 1
      %p29 = por %p27, %p28
      %p30 = scmp.ne.s32.totalorder %s22, %s25
      %p31 = scmp.eq.s32.totalorder %s12, 0
      %p32 = por %p30, %p31
      %p33 = scmp.ne.s32.totalorder %s22, %s25
      %p34 = scmp.eq.s32.totalorder %s17, 1
      %p35 = por %p33, %p34
      %p36 = scmp.ne.s32.totalorder %s25, %s26
      %p37 = scmp.eq.s32.totalorder %s17, 0
      %p38 = por %p36, %p37
      %p39 = scmp.ne.s32.totalorder %s25, %s26
      %p40 = scmp.eq.s32.totalorder %s18, 1
      %p41 = por %p39, %p40
      %p43 = scmp.ne.s32.totalorder %s26, %s42
      %p44 = scmp.eq.s32.totalorder %s18, 0
      %p45 = por %p43, %p44
      %s47 = sadd.s32 %s46, 1
      %p50 = scmp.eq.s32.totalorder %s12, 1
      %p51 = scmp.ne.s32.totalorder %s46, %s48
      %p52 = scmp.eq.s32.totalorder %s12, 0
      %p53 = por %p51, %p52
      %p54 = scmp.ne.s32.totalorder %s46, %s48
      %p55 = scmp.eq.s32.totalorder %s17, 1
      %p56 = por %p54, %p55
      %p57 = scmp.ne.s32.totalorder %s48, %s49
      %p58 = scmp.eq.s32.totalorder %s17, 0
      %p59 = por %p57, %p58
      %p60 = scmp.ne.s32.totalorder %s48, %s49
      %p61 = scmp.eq.s32.totalorder %s18, 1
      %p62 = por %p60, %p61
      %p64 = scmp.ne.s32.totalorder %s49, %s63
      %p65 = scmp.eq.s32.totalorder %s18, 0
      %p66 = por %p64, %p65
      %s68 = sadd.s32 %s67, 1
      %p71 = scmp.eq.s32.totalorder %s12, 1
      %p72 = scmp.ne.s32.totalorder %s67, %s69
      %p73 = scmp.eq.s32.totalorder %s12, 0
      %p74 = por %p72, %p73
      %p75 = scmp.ne.s32.totalorder %s67, %s69
      %p76 = scmp.eq.s32.totalorder %s17, 1
      %p77 = por %p75, %p76
      %p78 = scmp.ne.s32.totalorder %s69, %s70
      %p79 = scmp.eq.s32.totalorder %s17, 0
      %p80 = por %p78, %p79
      %p81 = scmp.ne.s32.totalorder %s69, %s70
      %p82 = scmp.eq.s32.totalorder %s18, 1
      %p83 = por %p81, %p82
      %p85 = scmp.ne.s32.totalorder %s70, %s84
      %p86 = scmp.eq.s32.totalorder %s18, 0
      %p87 = por %p85, %p86
      %s88 = ssub.s32 %s12, %s19
      %p89 = scmp.eq.s32.totalorder %s88, 0
      %s91 = sadd.s32 %s90, 1
      %s92 = scalar_select %p89, %s90, %s91
      %p95 = pneg %p89
      %p96 = scmp.eq.s32.totalorder %s12, 1
      %p97 = por %p95, %p96
      %p98 = scmp.ne.s32.totalorder %s90, %s93
      %p99 = scmp.eq.s32.totalorder %s12, 0
      %p100 = por %p98, %p99
      %p101 = scmp.ne.s32.totalorder %s90, %s93
      %p102 = scmp.eq.s32.totalorder %s17, 1
      %p103 = por %p101, %p102
      %p104 = scmp.ne.s32.totalorder %s93, %s94
      %p105 = scmp.eq.s32.totalorder %s17, 0
      %p106 = por %p104, %p105
      %p107 = scmp.ne.s32.totalorder %s93, %s94
      %p108 = scmp.eq.s32.totalorder %s18, 1
      %p109 = por %p107, %p108
      %p111 = scmp.ne.s32.totalorder %s94, %s110
      %p112 = scmp.eq.s32.totalorder %s18, 0
      %p113 = por %p111, %p112
      %s115 = sadd.s32 %s114, 1
      %p118 = scmp.eq.s32.totalorder %s12, 1
      %p119 = scmp.ne.s32.totalorder %s114, %s116
      %p120 = scmp.eq.s32.totalorder %s12, 0
      %p121 = por %p119, %p120
      %p122 = scmp.ne.s32.totalorder %s114, %s116
      %p123 = scmp.eq.s32.totalorder %s17, 1
      %p124 = por %p122, %p123
      %p125 = scmp.ne.s32.totalorder %s116, %s117
      %p126 = scmp.eq.s32.totalorder %s17, 0
      %p127 = por %p125, %p126
      %p128 = scmp.ne.s32.totalorder %s116, %s117
      %p129 = scmp.eq.s32.totalorder %s18, 1
      %p130 = por %p128, %p129
      %p132 = scmp.ne.s32.totalorder %s117, %s131
      %p133 = scmp.eq.s32.totalorder %s18, 0
      %p134 = por %p132, %p133
      %s136 = sadd.s32 %s135, 1
      %p139 = scmp.eq.s32.totalorder %s12, 1
      %p140 = scmp.ne.s32.totalorder %s135, %s137
      %p141 = scmp.eq.s32.totalorder %s12, 0
      %p142 = por %p140, %p141
      %p143 = scmp.ne.s32.totalorder %s135, %s137
      %p144 = scmp.eq.s32.totalorder %s17, 1
      %p145 = por %p143, %p144
      %p146 = scmp.ne.s32.totalorder %s137, %s138
      %p147 = scmp.eq.s32.totalorder %s17, 0
      %p148 = por %p146, %p147
      %p149 = scmp.ne.s32.totalorder %s137, %s138
      %p150 = scmp.eq.s32.totalorder %s18, 1
      %p151 = por %p149, %p150
      %p153 = scmp.ne.s32.totalorder %s138, %s152
      %p154 = scmp.eq.s32.totalorder %s18, 0
      %p155 = por %p153, %p154
      %p156 = scmp.le.s32.totalorder 1, %s12
      %p157 = scmp.lt.s32.totalorder %s12, 3
      %p158 = pnand %p156, %p157
      %p159 = pneg %p158
      // Predicated region
      $region9: #{std_conv_forward.2} parent=5 // pred_check
        _
      $region10: #{std_conv_forward.2} parent=5 // pred_check_branch
        %161 = sbr.rel (%p158) target = $region12
      $region11: #{std_conv_forward.2} parent=5 // pred_region
        %s162 = ssub.s32 %s12, 1
        // Predicated region
        $region13: #{std_conv_forward.2} parent=11 // pred_check
          %p163 = pneg %p59
        $region14: #{std_conv_forward.2} parent=11 // pred_check_branch
          %165 = sbr.rel (%p163) target = $region16
        $region15: #{std_conv_forward.2} parent=11 // pred_region
          _
        $region16: #{std_conv_forward.2} parent=11 // pred_fallthru
          _
        // Predicated region
        $region17: #{std_conv_forward.2} parent=11 // pred_check
          %p166 = pneg %p80
        $region18: #{std_conv_forward.2} parent=11 // pred_check_branch
          %168 = sbr.rel (%p166) target = $region20
        $region19: #{std_conv_forward.2} parent=11 // pred_region
          _
        $region20: #{std_conv_forward.2} parent=11 // pred_fallthru
          _
      $region12: #{std_conv_forward.2} parent=5 // pred_fallthru
        _
      %p169 = scmp.lt.s32.totalorder %s12, 2
      // Predicated region
      $region21: #{std_conv_forward.2} parent=5 // pred_check
        %p170 = pneg %p169
      $region22: #{std_conv_forward.2} parent=5 // pred_check_branch
        %172 = sbr.rel (%p170) target = $region24
      $region23: #{std_conv_forward.2} parent=5 // pred_region
        // Predicated region
        $region25: #{std_conv_forward.2} parent=23 // pred_check
          %p173 = pneg %p32
        $region26: #{std_conv_forward.2} parent=23 // pred_check_branch
          %175 = sbr.rel (%p173) target = $region28
        $region27: #{std_conv_forward.2} parent=23 // pred_region
          %s176 = sand.u32 %s22, 1
          %s177 = sand.u32 %s22, 1
          %s178 = smul.addr %s177, 20
          %s179 = scalar_lea.vmem [#allocation2], %s178
          %s180 = smul.addr %s12, 4
          %s181 = scalar_lea.vmem %s0, %s180
          // Predicated region
          $region29: #{std_conv_forward.2} parent=27 // pred_check
            _
          $region30: #{std_conv_forward.2} parent=27 // pred_check_branch
            %183 = sbr.rel (0) target = $region32
          $region31: #{std_conv_forward.2} parent=27 // pred_region
            // Predicated region
            $region33: #{std_conv_forward.2} parent=31 // pred_check
              _
            $region34: #{std_conv_forward.2} parent=31 // pred_check_branch
              %185 = sbr.rel target = $region36
            $region35: #{std_conv_forward.2} parent=31 // pred_region
              // Predicated region
              $region48: #{std_conv_forward.2} parent=35 // pred_check
                _
              $region49: #{std_conv_forward.2} parent=35 // pred_check_branch
                %208 = sbr.rel (0) target = $region51
              $region50: #{std_conv_forward.2} parent=35 // pred_region
                loop: start=0, step=1, limit=1
                $region52: #{std_conv_forward.2} parent=50 // loop_pre_header
                  _
                $region53: #{std_conv_forward.2} parent=50 // loop_header
                  %s210 = sphi 0, %s214
                  %p211 = scmp.ge.s32.totalorder %s210, 1
                  %s215 = sphi %s181, %s181
                  %s216 = sphi %s179, %s179
                $region54: #{std_conv_forward.2} parent=50 // loop_header_branch
                  %213 = sbr.rel (%p211) target = $region58
                $region55: #{std_conv_forward.2} parent=50 // loop_body
                  _
                $region56: #{std_conv_forward.2} parent=50 // loop_footer
                  %s214 = sadd.s32 1, %s210
                $region57: #{std_conv_forward.2} parent=50 // loop_footer_branch
                  %209 = sbr.rel target = $region53
                $region58: #{std_conv_forward.2} parent=50 // loop_exit
                  _
                loop: start=0, step=1, limit=1
                $region59: #{std_conv_forward.2} parent=50 // loop_pre_header
                  _
                $region60: #{std_conv_forward.2} parent=50 // loop_header
                  %s219 = sphi 0, %s223
                  %p220 = scmp.ge.s32.totalorder %s219, 1
                  %s224 = sphi %s181, %s181
                  %s225 = sphi %s179, %s179
                $region61: #{std_conv_forward.2} parent=50 // loop_header_branch
                  %222 = sbr.rel (%p220) target = $region65
                $region62: #{std_conv_forward.2} parent=50 // loop_body
                  %v226 = vld [vmem:[%s224] sm:$0xf]
                  %227 = vst [vmem:[%s225] sm:$0xf] %v226
                  %v228 = vld [vmem:[%s224 + $0x8] sm:$0xf]
                  %229 = vst [vmem:[%s225 + $0x4] sm:$0xf] %v228
                  %v230 = vld [vmem:[%s224 + $0x10] sm:$0xf]
                  %231 = vst [vmem:[%s225 + $0x8] sm:$0xf] %v230
                  %v232 = vld [vmem:[%s224 + $0x18] sm:$0xf]
                  %233 = vst [vmem:[%s225 + $0xc] sm:$0xf] %v232
                  %v234 = vld [vmem:[%s224 + $0x20] sm:$0xf]
                  %235 = vst [vmem:[%s225 + $0x10] sm:$0xf] %v234
                $region63: #{std_conv_forward.2} parent=50 // loop_footer
                  %s223 = sadd.s32 1, %s219
                $region64: #{std_conv_forward.2} parent=50 // loop_footer_branch
                  %218 = sbr.rel target = $region60
                $region65: #{std_conv_forward.2} parent=50 // loop_exit
                  _
              $region51: #{std_conv_forward.2} parent=35 // pred_fallthru
                _
            $region36: #{std_conv_forward.2} parent=31 // pred_fallthru
              _
            // Predicated region
            $region37: #{std_conv_forward.2} parent=31 // pred_check
              _
            $region38: #{std_conv_forward.2} parent=31 // pred_check_branch
              %187 = sbr.rel (0) target = $region40
            $region39: #{std_conv_forward.2} parent=31 // pred_region
              loop: start=0, step=1, limit=1
              $region41: #{std_conv_forward.2} parent=39 // loop_pre_header
                _
              $region42: #{std_conv_forward.2} parent=39 // loop_header
                %s190 = sphi 0, %s194
                %p191 = scmp.ge.s32.totalorder %s190, 1
                %s195 = sphi %s181, %s181
                %s196 = sphi %s179, %s179
              $region43: #{std_conv_forward.2} parent=39 // loop_header_branch
                %193 = sbr.rel (%p191) target = $region47
              $region44: #{std_conv_forward.2} parent=39 // loop_body
                %v197 = vld [vmem:[%s195] sm:$0xf]
                %198 = vst [vmem:[%s196] sm:$0xf] %v197
                %v199 = vld [vmem:[%s195 + $0x8] sm:$0xf]
                %200 = vst [vmem:[%s196 + $0x4] sm:$0xf] %v199
                %v201 = vld [vmem:[%s195 + $0x10] sm:$0xf]
                %202 = vst [vmem:[%s196 + $0x8] sm:$0xf] %v201
                %v203 = vld [vmem:[%s195 + $0x18] sm:$0xf]
                %204 = vst [vmem:[%s196 + $0xc] sm:$0xf] %v203
                %v205 = vld [vmem:[%s195 + $0x20] sm:$0xf]
                %206 = vst [vmem:[%s196 + $0x10] sm:$0xf] %v205
              $region45: #{std_conv_forward.2} parent=39 // loop_footer
                %s194 = sadd.s32 1, %s190
              $region46: #{std_conv_forward.2} parent=39 // loop_footer_branch
                %189 = sbr.rel target = $region42
              $region47: #{std_conv_forward.2} parent=39 // loop_exit
                _
            $region40: #{std_conv_forward.2} parent=31 // pred_fallthru
              _
          $region32: #{std_conv_forward.2} parent=27 // pred_fallthru
            _
          %236 = vnop
        $region28: #{std_conv_forward.2} parent=23 // pred_fallthru
          _
      $region24: #{std_conv_forward.2} parent=5 // pred_fallthru
        _
      %p237 = scmp.le.s32.totalorder 1, %s12
      %p238 = scmp.lt.s32.totalorder %s12, 3
      %p239 = pnand %p237, %p238
      %p240 = pneg %p239
      // Predicated region
      $region66: #{std_conv_forward.2} parent=5 // pred_check
        _
      $region67: #{std_conv_forward.2} parent=5 // pred_check_branch
        %242 = sbr.rel (%p239) target = $region69
      $region68: #{std_conv_forward.2} parent=5 // pred_region
        %s243 = ssub.s32 %s12, 1
        %s244 = sand.u32 %s25, 1
        %s245 = sand.u32 %s25, 1
        %s246 = smul.addr %s245, 20
        %s247 = scalar_lea.vmem [#allocation2], %s246
        // Predicated region
        $region70: #{std_conv_forward.2} parent=68 // pred_check
          %p248 = pneg %p38
        $region71: #{std_conv_forward.2} parent=68 // pred_check_branch
          %250 = sbr.rel (%p248) target = $region73
        $region72: #{std_conv_forward.2} parent=68 // pred_region
          _
        $region73: #{std_conv_forward.2} parent=68 // pred_fallthru
          _
        %s251 = sand.u32 %s25, 1
        %s252 = sand.u32 %s25, 1
        %s253 = smul.addr %s252, 20
        %s254 = scalar_lea.vmem [#allocation2], %s253
        %p255 = pneg %p38
        %p256 = pneg %p35
        %p257 = pneg %p59
        %p258 = pneg %p56
        %p259 = pneg %p80
        %p260 = pneg %p77
        %p261 = pneg %p106
        %p262 = pneg %p103
        %p263 = scmp.lt.s32.totalorder %s17, 1
        %s264 = scalar_select %p263, %s17, 1
        %s265 = smul.addr %s264, 4
        %s266 = scalar_lea.vmem %s3, %s265
        %p267 = pneg %p127
        %p268 = pneg %p124
        %p269 = pneg %p148
        %p270 = pneg %p145
        %p271 = scmp.lt.s32.totalorder %s17, 1
        %s272 = scalar_select %p271, %s17, 1
        %s273 = smul.addr %s272, 4
        %s274 = scalar_lea.vmem %s3, %s273
        %p276 = scmp.eq.s32.totalorder %s17, 0
        // Predicated region
        $region74: #{std_conv_forward.2} parent=68 // pred_check
          %p277 = pneg %p276
        $region75: #{std_conv_forward.2} parent=68 // pred_check_branch
          %279 = sbr.rel (%p277) target = $region77
        $region76: #{std_conv_forward.2} parent=68 // pred_region
          %vm280 = vcmask 7168
          %281 = vst.msk [vmem:[%s4] sm:$0xff] %vm280, 0.0
          %282 = vst.msk [vmem:[%s5] sm:$0xff] %vm280, 0.0
        $region77: #{std_conv_forward.2} parent=68 // pred_fallthru
          _
        %v283 = vld [vmem:[%s1] sm:$0xf]
        %v284 = vld [vmem:[%s247] sm:$0xf]
        %v285 = vld [vmem:[%s247 + $0x4] sm:$0xf]
        %v286 = vld [vmem:[%s247 + $0x8] sm:$0xf]
        %v287 = vld [vmem:[%s247 + $0xc] sm:$0xf]
        %v288 = vld [vmem:[%s247 + $0x10] sm:$0x3]
        %v289 = vld [vmem:[%s2] sm:$0xff]
        %291 = vset.pattern.permute.xlu0 0
        %292 = vperm.xlu0 %291, %v289
        %v293 = vpop.permute.xlu0 %292
        %v300 = vunpack.c.l.b16 %v284
        %v301 = vunpack.c.l.b16 %v285
        %v302 = vunpack.c.l.b16 %v286
        %v303 = vunpack.c.l.b16 %v287
        %v304 = vunpack.c.l.b16 %v288
        %v305 = vpack.c.b16 %v301, %v300
        %v306 = vpack.c.b16 %v303, %v302
        %v307 = vpack.c.b16 %v304, %v304
        %vm310 = vcmask 293888
        %v312 = vsel %vm310, %v283, 0
        %vm314 = vcmask 1041408
        %v316 = vsel %vm314, %v307, 0
        %318 = vmatprep.subr.bf16.mxu0 0
        %319 = vmatpush1.bf16.msra.mxu0 %v305
        %320 = vmatprep.subr.bf16.mxu0 0
        %321 = vmatpush1.bf16.msra.mxu0 %v306
        %322 = vmatprep.subr.bf16.mxu0 0
        %323 = vmatpush1.bf16.msra.mxu0 %v316
        %324 = vmatprep.subr.bf16.mxu0 0
        %325 = vmatpush1.bf16.msra.mxu0 0
        %326 = vmatprep.subr.bf16.mxu0 0
        %327 = vmatpush1.bf16.msra.mxu0 0
        %328 = vmatprep.subr.bf16.mxu0 0
        %329 = vmatpush1.bf16.msra.mxu0 0
        %330 = vmatprep.subr.bf16.mxu0 0
        %331 = vmatpush1.bf16.msra.mxu0 0
        %332 = vmatprep.subr.bf16.mxu0 0
        %333 = vmatpush1.bf16.msra.mxu0 0
        %334 = vmatprep.subr.bf16.mxu0 0
        %335 = vmatpush1.bf16.msra.mxu0 0
        %336 = vmatprep.subr.bf16.mxu0 0
        %337 = vmatpush1.bf16.msra.mxu0 0
        %338 = vmatprep.subr.bf16.mxu0 0
        %339 = vmatpush1.bf16.msra.mxu0 0
        %340 = vmatprep.subr.bf16.mxu0 0
        %341 = vmatpush1.bf16.msra.mxu0 0
        %342 = vmatprep.subr.bf16.mxu0 0
        %343 = vmatpush1.bf16.msra.mxu0 0
        %344 = vmatprep.subr.bf16.mxu0 0
        %345 = vmatpush1.bf16.msra.mxu0 0
        %346 = vmatprep.subr.bf16.mxu0 0
        %347 = vmatpush1.bf16.msra.mxu0 0
        %348 = vmatprep.subr.bf16.mxu0 0
        %349 = vmatpush1.bf16.msra.mxu0 0
        %350 = vmatprep.mubr.bf16.mxu0 0
        %351 = vmatmul.mubr.bf16.gmra.mrb[0].mxu0 %v312
        %v352 = vpop.f32.mrb[0].mxu0
        %v353 = vadd.f32 %v293, %v352
        %v354 = vpop.f32.mrb[0].mxu0
        %v355 = vpop.f32.mrb[0].mxu0
        %v356 = vpop.f32.mrb[0].mxu0
        %357 = vdwg.mxu0
        %v358 = vmax.f32 %v353, 0.0
        %v359 = vpack.c.bf16 %v358, %v358
        %360 = vst [vmem:[%s274] sm:$0xf] %v359
        %v361 = vlaneseq
        %v362 = vand.u32 %v361, 127
        %vm363 = vcmp.lt.s32.totalorder %v362, 64
        %v364 = vsel %vm363, %v358, 0.0
        %v365 = vld [vmem:[%s4] sm:$0xff]
        %366 = vadd.xlane.f32.xlu0 %v364
        %v367 = vpop.xlane.xlu0 %366
        %v368 = vadd.f32 %v365, %v367
        %vm369 = vcmask 7168
        %370 = vst.msk [vmem:[%s4] sm:$0xff] %vm369, %v368
        %v371 = vld [vmem:[%s5] sm:$0xff]
        %v372 = vmul.f32 %v364, %v364
        %373 = vadd.xlane.f32.xlu0 %v372
        %v374 = vpop.xlane.xlu0 %373
        %v375 = vadd.f32 %v371, %v374
        %376 = vst.msk [vmem:[%s5] sm:$0xff] %vm369, %v375
        %p377 = scmp.lt.s32.totalorder %s17, 1
        %s378 = scalar_select %p377, %s17, 1
        %s379 = smul.addr %s378, 4
        %s380 = scalar_lea.vmem %s3, %s379
        // Predicated region
        $region78: #{std_conv_forward.2} parent=68 // pred_check
          %p381 = pneg %p103
        $region79: #{std_conv_forward.2} parent=68 // pred_check_branch
          %383 = sbr.rel (%p381) target = $region81
        $region80: #{std_conv_forward.2} parent=68 // pred_region
          _
        $region81: #{std_conv_forward.2} parent=68 // pred_fallthru
          _
        // Predicated region
        $region82: #{std_conv_forward.2} parent=68 // pred_check
          %p384 = pneg %p124
        $region83: #{std_conv_forward.2} parent=68 // pred_check_branch
          %386 = sbr.rel (%p384) target = $region85
        $region84: #{std_conv_forward.2} parent=68 // pred_region
          _
        $region85: #{std_conv_forward.2} parent=68 // pred_fallthru
          _
        // Predicated region
        $region86: #{std_conv_forward.2} parent=68 // pred_check
          %p387 = pneg %p145
        $region87: #{std_conv_forward.2} parent=68 // pred_check_branch
          %389 = sbr.rel (%p387) target = $region89
        $region88: #{std_conv_forward.2} parent=68 // pred_region
          _
        $region89: #{std_conv_forward.2} parent=68 // pred_fallthru
          _
        // Predicated region
        $region90: #{std_conv_forward.2} parent=68 // pred_check
          %p390 = pneg %p124
        $region91: #{std_conv_forward.2} parent=68 // pred_check_branch
          %392 = sbr.rel (%p390) target = $region93
        $region92: #{std_conv_forward.2} parent=68 // pred_region
          _
        $region93: #{std_conv_forward.2} parent=68 // pred_fallthru
          _
        // Predicated region
        $region94: #{std_conv_forward.2} parent=68 // pred_check
          %p393 = pneg %p145
        $region95: #{std_conv_forward.2} parent=68 // pred_check_branch
          %395 = sbr.rel (%p393) target = $region97
        $region96: #{std_conv_forward.2} parent=68 // pred_region
          _
        $region97: #{std_conv_forward.2} parent=68 // pred_fallthru
          _
      $region69: #{std_conv_forward.2} parent=5 // pred_fallthru
        _
      %p396 = scmp.le.s32.totalorder 2, %s12
      // Predicated region
      $region98: #{std_conv_forward.2} parent=5 // pred_check
        %p397 = pneg %p396
      $region99: #{std_conv_forward.2} parent=5 // pred_check_branch
        %399 = sbr.rel (%p397) target = $region101
      $region100: #{std_conv_forward.2} parent=5 // pred_region
        %s400 = ssub.s32 %s12, 2
        // Predicated region
        $region102: #{std_conv_forward.2} parent=100 // pred_check
          %p401 = pneg %p109
        $region103: #{std_conv_forward.2} parent=100 // pred_check_branch
          %403 = sbr.rel (%p401) target = $region105
        $region104: #{std_conv_forward.2} parent=100 // pred_region
          %p404 = scmp.lt.s32.totalorder %s18, 1
          %s405 = scalar_select %p404, %s18, 1
          %s406 = smul.addr %s405, 4
          %s407 = scalar_lea.vmem %s3, %s406
        $region105: #{std_conv_forward.2} parent=100 // pred_fallthru
          _
      $region101: #{std_conv_forward.2} parent=5 // pred_fallthru
        _
    $region6: #{std_conv_forward.2} parent=1 // loop_footer
      %s16 = sadd.s32 1, %s12
    $region7: #{std_conv_forward.2} parent=1 // loop_footer_branch
      %11 = sbr.rel target = $region3
    $region8: #{std_conv_forward.2} parent=1 // loop_exit
      _

</llo_original>
